<compile_context>
chip_gen: v5e
topology: v5e:2x2
jax: 0.10.0
libtpu: 0.0.40
codegen_flags: <defaults>
</compile_context>

<pallas_src>
import jax
import jax.numpy as jnp
from jax.experimental import pallas as pl
from jax.experimental.pallas import tpu as pltpu

# Problem sizes (small, consistent with a "batch of graph samples")
B = 2        # batch of molecules
N = 16       # atoms per molecule (padded)
F = 32       # raw atom feature dim
H = 32       # message-passing hidden dim
HF = 32      # FFN hidden dim
O = 1        # prediction dim
T_STEPS = 3  # number of message passing iterations

BN = B * N       # flattened atom count
O_PAD = 128      # lane-dense padded output width


def molecule_kernel(x_ref, a_ref, pool_ref, w_in_ref, w_h_ref,
                    w1_ref, b1_ref, w2_ref, b2_ref, out_ref):
    x = x_ref[...]        # (BN, F)   flattened atom features
    a_bd = a_ref[...]     # (BN, BN)  block-diagonal adjacency
    pool = pool_ref[...]  # (B, BN)   mean-readout pooling matrix (1/N per atom)
    w_in = w_in_ref[...]  # (F, H)
    w_h = w_h_ref[...]    # (H, H)

    # ----- encoder: message passing (all single 2-D MXU matmuls) -----
    h0 = jnp.maximum(
        jnp.dot(x, w_in, preferred_element_type=jnp.float32), 0.0)   # (BN, H)
    h = h0
    for _ in range(T_STEPS):
        msg = jnp.dot(a_bd, h, preferred_element_type=jnp.float32)   # (BN, H)
        h = jnp.maximum(
            jnp.dot(msg, w_h, preferred_element_type=jnp.float32) + h0,
            0.0)                                                      # (BN, H)

    # ----- readout fused as a pooling matmul (stays on MXU path) -----
    mol = jnp.dot(pool, h, preferred_element_type=jnp.float32)        # (B, H)

    # ----- ffn head (output padded to 128 lanes -> unmasked store) -----
    z = jnp.maximum(
        jnp.dot(mol, w1_ref[...], preferred_element_type=jnp.float32) + b1_ref[...],
        0.0)                                                          # (B, HF)
    out = jnp.dot(z, w2_ref[...], preferred_element_type=jnp.float32) + b2_ref[...]
    out_ref[...] = out.astype(out_ref.dtype)                          # (B, O_PAD)


def molecule_model(x, a, params):
    w_in, w_h, w1, b1, w2, b2 = params

    # ---- wrapper-side layout prep (pure JAX, cheap, done per call) ----
    x_flat = x.reshape(BN, F)                                          # (BN, F)
    eye_b = jnp.eye(B, dtype=a.dtype)
    a_bd = jnp.einsum('bc,bij->bicj', eye_b, a).reshape(BN, BN)        # block-diag adjacency
    pool = jnp.kron(jnp.eye(B, dtype=jnp.float32),
                    jnp.ones((1, N), jnp.float32)) / float(N)          # (B, BN)
    w2p = jnp.zeros((HF, O_PAD), jnp.float32).at[:, :O].set(w2)        # lane-dense pad
    b2p = jnp.zeros((1, O_PAD), jnp.float32).at[:, :O].set(b2)

    vmem_spec = pl.BlockSpec(memory_space=pltpu.MemorySpace.VMEM)
    out_padded = pl.pallas_call(
        molecule_kernel,
        out_shape=jax.ShapeDtypeStruct((B, O_PAD), jnp.float32),
        in_specs=[vmem_spec] * 9,
        out_specs=vmem_spec,
    )(x_flat, a_bd, pool, w_in, w_h, w1, b1, w2p, b2p)

    return out_padded[:, :O]                                           # (B, O)


def init_params(key):
    k = jax.random.split(key, 6)
    w_in = jax.random.normal(k[0], (F, H), jnp.float32) * (1.0 / jnp.sqrt(F))
    w_h = jax.random.normal(k[1], (H, H), jnp.float32) * (1.0 / jnp.sqrt(H))
    w1 = jax.random.normal(k[2], (H, HF), jnp.float32) * (1.0 / jnp.sqrt(H))
    b1 = jnp.zeros((1, HF), jnp.float32)
    w2 = jax.random.normal(k[3], (HF, O), jnp.float32) * (1.0 / jnp.sqrt(HF))
    b2 = jnp.zeros((1, O), jnp.float32)
    return w_in, w_h, w1, b1, w2, b2


def make_inputs(key):
    kx, ka = jax.random.split(key)
    x = jax.random.normal(kx, (B, N, F), jnp.float32)
    # symmetric, row-normalized "adjacency" (dense synthetic graph)
    raw = jax.random.uniform(ka, (B, N, N), jnp.float32)
    adj = (raw + jnp.swapaxes(raw, 1, 2)) * 0.5
    adj = (adj > 0.7).astype(jnp.float32)
    adj = adj / jnp.maximum(adj.sum(axis=-1, keepdims=True), 1.0)
    return x, adj


def reference_forward(x, a, params):
    # pure-JAX reference mirroring the original (batched) module math
    w_in, w_h, w1, b1, w2, b2 = params
    h0 = jnp.maximum(jnp.einsum('bnf,fh->bnh', x, w_in), 0.0)
    h = h0
    for _ in range(T_STEPS):
        msg = jnp.einsum('bij,bjh->bih', a, h)
        h = jnp.maximum(jnp.einsum('bih,hk->bik', msg, w_h) + h0, 0.0)
    # TODO(synk): mean divides by padded atom count N; real variable-size graphs
    # would need a mask / true-count divisor (same behavior in kernel + reference).
    mol = jnp.mean(h, axis=1)
    z = jnp.maximum(mol @ w1 + b1, 0.0)
    return z @ w2 + b2


if __name__ == "__main__":
    key = jax.random.PRNGKey(0)
    kp, ki = jax.random.split(key)
    params = init_params(kp)
    x, adj = make_inputs(ki)

    out = molecule_model(x, adj, params)
    out = jax.block_until_ready(out)

    ref = reference_forward(x, adj, params)
    assert out.shape == (B, O), out.shape
    assert jnp.allclose(out, ref, atol=1e-4, rtol=1e-4), (out, ref)
    print("KERNEL_OK")
</pallas_src>

<mosaic_0001>
module attributes {stable_mosaic.version = 11 : i64} {
  func.func @molecule_kernel(%arg0: memref<32x32xf32, #tpu.memory_space<vmem>>, %arg1: memref<32x32xf32, #tpu.memory_space<vmem>>, %arg2: memref<2x32xf32, #tpu.memory_space<vmem>>, %arg3: memref<32x32xf32, #tpu.memory_space<vmem>>, %arg4: memref<32x32xf32, #tpu.memory_space<vmem>>, %arg5: memref<32x32xf32, #tpu.memory_space<vmem>>, %arg6: memref<1x32xf32, #tpu.memory_space<vmem>>, %arg7: memref<32x128xf32, #tpu.memory_space<vmem>>, %arg8: memref<1x128xf32, #tpu.memory_space<vmem>>, %arg9: memref<2x128xf32, #tpu.memory_space<vmem>>) attributes {dimension_semantics = [], scalar_prefetch = 0 : i64, scratch_operands = 0 : i64, tpu.core_type = #tpu.core_type<tc>} {
    %c0 = arith.constant 0 : index
    %c0_0 = arith.constant 0 : index
    %0 = vector.load %arg0[%c0, %c0_0] : memref<32x32xf32, #tpu.memory_space<vmem>>, vector<32x32xf32>
    %c0_1 = arith.constant 0 : index
    %c0_2 = arith.constant 0 : index
    %1 = vector.load %arg1[%c0_1, %c0_2] : memref<32x32xf32, #tpu.memory_space<vmem>>, vector<32x32xf32>
    %c0_3 = arith.constant 0 : index
    %c0_4 = arith.constant 0 : index
    %2 = vector.load %arg2[%c0_3, %c0_4] : memref<2x32xf32, #tpu.memory_space<vmem>>, vector<2x32xf32>
    %c0_5 = arith.constant 0 : index
    %c0_6 = arith.constant 0 : index
    %3 = vector.load %arg3[%c0_5, %c0_6] : memref<32x32xf32, #tpu.memory_space<vmem>>, vector<32x32xf32>
    %c0_7 = arith.constant 0 : index
    %c0_8 = arith.constant 0 : index
    %4 = vector.load %arg4[%c0_7, %c0_8] : memref<32x32xf32, #tpu.memory_space<vmem>>, vector<32x32xf32>
    %cst = arith.constant dense<0.000000e+00> : vector<32x32xf32>
    %5 = tpu.matmul %0, %3, %cst {dimension_numbers = #tpu.dot_dimension_numbers<[1], [0], [0], [1], [0, 0, 1, 1], [], []>} : vector<32x32xf32>, vector<32x32xf32>, vector<32x32xf32> -> vector<32x32xf32>
    %cst_9 = arith.constant 0.000000e+00 : f32
    %6 = vector.broadcast %cst_9 : f32 to vector<32x32xf32>
    %7 = arith.maximumf %5, %6 : vector<32x32xf32>
    %cst_10 = arith.constant dense<0.000000e+00> : vector<32x32xf32>
    %8 = tpu.matmul %1, %7, %cst_10 {dimension_numbers = #tpu.dot_dimension_numbers<[1], [0], [0], [1], [0, 0, 1, 1], [], []>} : vector<32x32xf32>, vector<32x32xf32>, vector<32x32xf32> -> vector<32x32xf32>
    %cst_11 = arith.constant dense<0.000000e+00> : vector<32x32xf32>
    %9 = tpu.matmul %8, %4, %cst_11 {dimension_numbers = #tpu.dot_dimension_numbers<[1], [0], [0], [1], [0, 0, 1, 1], [], []>} : vector<32x32xf32>, vector<32x32xf32>, vector<32x32xf32> -> vector<32x32xf32>
    %10 = arith.addf %9, %7 : vector<32x32xf32>
    %cst_12 = arith.constant 0.000000e+00 : f32
    %11 = vector.broadcast %cst_12 : f32 to vector<32x32xf32>
    %12 = arith.maximumf %10, %11 : vector<32x32xf32>
    %cst_13 = arith.constant dense<0.000000e+00> : vector<32x32xf32>
    %13 = tpu.matmul %1, %12, %cst_13 {dimension_numbers = #tpu.dot_dimension_numbers<[1], [0], [0], [1], [0, 0, 1, 1], [], []>} : vector<32x32xf32>, vector<32x32xf32>, vector<32x32xf32> -> vector<32x32xf32>
    %cst_14 = arith.constant dense<0.000000e+00> : vector<32x32xf32>
    %14 = tpu.matmul %13, %4, %cst_14 {dimension_numbers = #tpu.dot_dimension_numbers<[1], [0], [0], [1], [0, 0, 1, 1], [], []>} : vector<32x32xf32>, vector<32x32xf32>, vector<32x32xf32> -> vector<32x32xf32>
    %15 = arith.addf %14, %7 : vector<32x32xf32>
    %cst_15 = arith.constant 0.000000e+00 : f32
    %16 = vector.broadcast %cst_15 : f32 to vector<32x32xf32>
    %17 = arith.maximumf %15, %16 : vector<32x32xf32>
    %cst_16 = arith.constant dense<0.000000e+00> : vector<32x32xf32>
    %18 = tpu.matmul %1, %17, %cst_16 {dimension_numbers = #tpu.dot_dimension_numbers<[1], [0], [0], [1], [0, 0, 1, 1], [], []>} : vector<32x32xf32>, vector<32x32xf32>, vector<32x32xf32> -> vector<32x32xf32>
    %cst_17 = arith.constant dense<0.000000e+00> : vector<32x32xf32>
    %19 = tpu.matmul %18, %4, %cst_17 {dimension_numbers = #tpu.dot_dimension_numbers<[1], [0], [0], [1], [0, 0, 1, 1], [], []>} : vector<32x32xf32>, vector<32x32xf32>, vector<32x32xf32> -> vector<32x32xf32>
    %20 = arith.addf %19, %7 : vector<32x32xf32>
    %cst_18 = arith.constant 0.000000e+00 : f32
    %21 = vector.broadcast %cst_18 : f32 to vector<32x32xf32>
    %22 = arith.maximumf %20, %21 : vector<32x32xf32>
    %cst_19 = arith.constant dense<0.000000e+00> : vector<2x32xf32>
    %23 = tpu.matmul %2, %22, %cst_19 {dimension_numbers = #tpu.dot_dimension_numbers<[1], [0], [0], [1], [0, 0, 1, 1], [], []>} : vector<2x32xf32>, vector<32x32xf32>, vector<2x32xf32> -> vector<2x32xf32>
    %c0_20 = arith.constant 0 : index
    %c0_21 = arith.constant 0 : index
    %24 = vector.load %arg5[%c0_20, %c0_21] : memref<32x32xf32, #tpu.memory_space<vmem>>, vector<32x32xf32>
    %cst_22 = arith.constant dense<0.000000e+00> : vector<2x32xf32>
    %25 = tpu.matmul %23, %24, %cst_22 {dimension_numbers = #tpu.dot_dimension_numbers<[1], [0], [0], [1], [0, 0, 1, 1], [], []>} : vector<2x32xf32>, vector<32x32xf32>, vector<2x32xf32> -> vector<2x32xf32>
    %c0_23 = arith.constant 0 : index
    %c0_24 = arith.constant 0 : index
    %26 = vector.load %arg6[%c0_23, %c0_24] : memref<1x32xf32, #tpu.memory_space<vmem>>, vector<1x32xf32>
    %27 = vector.broadcast %26 : vector<1x32xf32> to vector<2x32xf32>
    %28 = arith.addf %25, %27 : vector<2x32xf32>
    %cst_25 = arith.constant 0.000000e+00 : f32
    %29 = vector.broadcast %cst_25 : f32 to vector<2x32xf32>
    %30 = arith.maximumf %28, %29 : vector<2x32xf32>
    %c0_26 = arith.constant 0 : index
    %c0_27 = arith.constant 0 : index
    %31 = vector.load %arg7[%c0_26, %c0_27] : memref<32x128xf32, #tpu.memory_space<vmem>>, vector<32x128xf32>
    %cst_28 = arith.constant dense<0.000000e+00> : vector<2x128xf32>
    %32 = tpu.matmul %30, %31, %cst_28 {dimension_numbers = #tpu.dot_dimension_numbers<[1], [0], [0], [1], [0, 0, 1, 1], [], []>} : vector<2x32xf32>, vector<32x128xf32>, vector<2x128xf32> -> vector<2x128xf32>
    %c0_29 = arith.constant 0 : index
    %c0_30 = arith.constant 0 : index
    %33 = vector.load %arg8[%c0_29, %c0_30] : memref<1x128xf32, #tpu.memory_space<vmem>>, vector<1x128xf32>
    %34 = vector.broadcast %33 : vector<1x128xf32> to vector<2x128xf32>
    %35 = arith.addf %32, %34 : vector<2x128xf32>
    %c0_31 = arith.constant 0 : index
    %c0_32 = arith.constant 0 : index
    %36 = vector.load %arg9[%c0_31, %c0_32] : memref<2x128xf32, #tpu.memory_space<vmem>>, vector<2x128xf32>
    tpu.vector_store %arg9[%c0_31, %c0_32], %35 {strides = array<i32>} : memref<2x128xf32, #tpu.memory_space<vmem>>, vector<2x128xf32>,
    return
  }
}

</mosaic_0001>

<llo_original>
// kernel: tpu_custom_call.1
$region0: #{tpu_custom_call.1}
  #allocation0 [shape = 'u32[]', space=smem, size = 0x4, offset = 0x4, fixed_abs, tag = 'smem constant byte address 0x4 - core index']
  #allocation1 [shape = 'u32[72,128]{1,0:T(1,128)}', space=vmem, size = 0x9000, scoped, tag = 'internal scratch']
  %s0 = inlined_call_operand.hbm [shape: f32[32,32], index: 0, kind: input, shape index: {}]
  %s1 = inlined_call_operand.hbm [shape: f32[32,32], index: 1, kind: input, shape index: {}]
  %s2 = inlined_call_operand.hbm [shape: f32[2,32], index: 2, kind: input, shape index: {}]
  %s3 = inlined_call_operand.hbm [shape: f32[32,32], index: 3, kind: input, shape index: {}]
  %s4 = inlined_call_operand.hbm [shape: f32[32,32], index: 4, kind: input, shape index: {}]
  %s5 = inlined_call_operand.hbm [shape: f32[32,32], index: 5, kind: input, shape index: {}]
  %s6 = inlined_call_operand.vmem [shape: f32[1,32], index: 6, kind: input, shape index: {}]
  %s7 = inlined_call_operand.hbm [shape: f32[32,128], index: 7, kind: input, shape index: {}]
  %s8 = inlined_call_operand.vmem [shape: f32[1,128], index: 8, kind: input, shape index: {}]
  %s9 = inlined_call_operand.hbm [shape: f32[2,128], index: 9, kind: output, shape index: {}]
  %s10 = sld [smem:[#allocation0]]
  $region74: #{tpu_custom_call.1} parent=0
    _
  %s12 = ssub.s32 1, %s10
  %s13 = scalar_select 0, %s12, %s10
  $region1: #{tpu_custom_call.1} parent=0
    #allocation2 [shape = 'u8[16384]{0}', space=vmem, size = 0x4000, scoped, tag = 'input window, operand 0, single buffered']
    #allocation3 [shape = 's32[1]{0}', space=sflag, size = 0x4, scoped, tag = 'scoped memory for tpu_custom_call.1']
    #allocation4 [shape = 's32[1]{0}', space=sflag, size = 0x4, scoped, tag = 'scoped memory for tpu_custom_call.1']
    #allocation5 [shape = 'u8[16384]{0}', space=vmem, size = 0x4000, scoped, tag = 'input window, operand 1, single buffered']
    #allocation6 [shape = 's32[1]{0}', space=sflag, size = 0x4, scoped, tag = 'scoped memory for tpu_custom_call.1']
    #allocation7 [shape = 'u8[1024]{0}', space=vmem, size = 0x400, scoped, tag = 'input window, operand 2, single buffered']
    #allocation8 [shape = 'u8[16384]{0}', space=vmem, size = 0x4000, scoped, tag = 'input window, operand 3, single buffered']
    #allocation9 [shape = 's32[1]{0}', space=sflag, size = 0x4, scoped, tag = 'scoped memory for tpu_custom_call.1']
    #allocation10 [shape = 'u8[16384]{0}', space=vmem, size = 0x4000, scoped, tag = 'input window, operand 4, single buffered']
    #allocation11 [shape = 'u8[16384]{0}', space=vmem, size = 0x4000, scoped, tag = 'input window, operand 5, single buffered']
    #allocation12 [shape = 's32[1]{0}', space=sflag, size = 0x4, scoped, tag = 'scoped memory for tpu_custom_call.1']
    #allocation13 [shape = 'u8[16384]{0}', space=vmem, size = 0x4000, scoped, tag = 'input window, operand 7, single buffered']
    #allocation14 [shape = 'u8[1024]{0}', space=vmem, size = 0x400, scoped, tag = 'output window, operand 0, single buffered']
    %14 = vsyncpa [#allocation3], 0
    %15 = vsyncpa [#allocation6], 0
    %16 = vsyncpa [#allocation9], 0
    %17 = vsyncpa [#allocation12], 0
    %18 = vsyncpa [#allocation4], 0
    // Predicated region
    $region2: #{tpu_custom_call.1} parent=1 // pred_check
      _
    $region3: #{tpu_custom_call.1} parent=1 // pred_check_branch
      %20 = sbr.rel (0) target = $region5
    $region4: #{tpu_custom_call.1} parent=1 // pred_region
      %22 = vsyncadd [#allocation3], 0
      %s23 = sshll.u32 %s0, 4
      %s24 = int_to_ptr.hbm [resolvable:$true] %s23
      %s25 = sshll.u32 [#allocation2], 4
      %s26 = int_to_ptr.vmem [resolvable:$true] %s25
      %31 = dma.hbm_to_vmem [thread:$0]  %s24, 512, %s26, [#allocation3], 128, 128, 8
    $region5: #{tpu_custom_call.1} parent=1 // pred_fallthru
      _
    // Predicated region
    $region6: #{tpu_custom_call.1} parent=1 // pred_check
      _
    $region7: #{tpu_custom_call.1} parent=1 // pred_check_branch
      %33 = sbr.rel (0) target = $region9
    $region8: #{tpu_custom_call.1} parent=1 // pred_region
      %35 = vsyncadd [#allocation6], 0
      %s36 = sshll.u32 %s1, 4
      %s37 = int_to_ptr.hbm [resolvable:$true] %s36
      %s38 = sshll.u32 [#allocation5], 4
      %s39 = int_to_ptr.vmem [resolvable:$true] %s38
      %44 = dma.hbm_to_vmem [thread:$0]  %s37, 512, %s39, [#allocation6], 128, 128, 8
    $region9: #{tpu_custom_call.1} parent=1 // pred_fallthru
      _
    // Predicated region
    $region10: #{tpu_custom_call.1} parent=1 // pred_check
      _
    $region11: #{tpu_custom_call.1} parent=1 // pred_check_branch
      %46 = sbr.rel (0) target = $region13
    $region12: #{tpu_custom_call.1} parent=1 // pred_region
      %48 = vsyncadd [#allocation6], 0
      %s50 = sshll.u32 %s2, 4
      %s51 = int_to_ptr.hbm [resolvable:$true] %s50
      %s52 = sshll.u32 [#allocation7], 4
      %s53 = int_to_ptr.vmem [resolvable:$true] %s52
      %55 = dma.hbm_to_vmem [thread:$0]  %s51, 32, %s53, [#allocation6]
    $region13: #{tpu_custom_call.1} parent=1 // pred_fallthru
      _
    // Predicated region
    $region14: #{tpu_custom_call.1} parent=1 // pred_check
      _
    $region15: #{tpu_custom_call.1} parent=1 // pred_check_branch
      %57 = sbr.rel (0) target = $region17
    $region16: #{tpu_custom_call.1} parent=1 // pred_region
      %59 = vsyncadd [#allocation9], 0
      %s60 = sshll.u32 %s3, 4
      %s61 = int_to_ptr.hbm [resolvable:$true] %s60
      %s62 = sshll.u32 [#allocation8], 4
      %s63 = int_to_ptr.vmem [resolvable:$true] %s62
      %68 = dma.hbm_to_vmem [thread:$0]  %s61, 512, %s63, [#allocation9], 128, 128, 8
    $region17: #{tpu_custom_call.1} parent=1 // pred_fallthru
      _
    // Predicated region
    $region18: #{tpu_custom_call.1} parent=1 // pred_check
      _
    $region19: #{tpu_custom_call.1} parent=1 // pred_check_branch
      %70 = sbr.rel (0) target = $region21
    $region20: #{tpu_custom_call.1} parent=1 // pred_region
      %72 = vsyncadd [#allocation9], 0
      %s73 = sshll.u32 %s4, 4
      %s74 = int_to_ptr.hbm [resolvable:$true] %s73
      %s75 = sshll.u32 [#allocation10], 4
      %s76 = int_to_ptr.vmem [resolvable:$true] %s75
      %81 = dma.hbm_to_vmem [thread:$0]  %s74, 512, %s76, [#allocation9], 128, 128, 8
    $region21: #{tpu_custom_call.1} parent=1 // pred_fallthru
      _
    // Predicated region
    $region22: #{tpu_custom_call.1} parent=1 // pred_check
      _
    $region23: #{tpu_custom_call.1} parent=1 // pred_check_branch
      %83 = sbr.rel (0) target = $region25
    $region24: #{tpu_custom_call.1} parent=1 // pred_region
      %85 = vsyncadd [#allocation12], 0
      %s86 = sshll.u32 %s5, 4
      %s87 = int_to_ptr.hbm [resolvable:$true] %s86
      %s88 = sshll.u32 [#allocation11], 4
      %s89 = int_to_ptr.vmem [resolvable:$true] %s88
      %94 = dma.hbm_to_vmem [thread:$0]  %s87, 512, %s89, [#allocation12], 128, 128, 8
    $region25: #{tpu_custom_call.1} parent=1 // pred_fallthru
      _
    // Predicated region
    $region26: #{tpu_custom_call.1} parent=1 // pred_check
      _
    $region27: #{tpu_custom_call.1} parent=1 // pred_check_branch
      %96 = sbr.rel (0) target = $region29
    $region28: #{tpu_custom_call.1} parent=1 // pred_region
      _
    $region29: #{tpu_custom_call.1} parent=1 // pred_fallthru
      _
    // Predicated region
    $region30: #{tpu_custom_call.1} parent=1 // pred_check
      _
    $region31: #{tpu_custom_call.1} parent=1 // pred_check_branch
      %98 = sbr.rel (0) target = $region33
    $region32: #{tpu_custom_call.1} parent=1 // pred_region
      %100 = vsyncadd [#allocation12], 0
      %s101 = sshll.u32 %s7, 4
      %s102 = int_to_ptr.hbm [resolvable:$true] %s101
      %s103 = sshll.u32 [#allocation13], 4
      %s104 = int_to_ptr.vmem [resolvable:$true] %s103
      %109 = dma.hbm_to_vmem [thread:$0]  %s102, 512, %s104, [#allocation12], 128, 128, 8
    $region33: #{tpu_custom_call.1} parent=1 // pred_fallthru
      _
    // Predicated region
    $region34: #{tpu_custom_call.1} parent=1 // pred_check
      _
    $region35: #{tpu_custom_call.1} parent=1 // pred_check_branch
      %111 = sbr.rel (0) target = $region37
    $region36: #{tpu_custom_call.1} parent=1 // pred_region
      _
    $region37: #{tpu_custom_call.1} parent=1 // pred_fallthru
      _
    // Predicated region
    $region38: #{tpu_custom_call.1} parent=1 // pred_check
      _
    $region39: #{tpu_custom_call.1} parent=1 // pred_check_branch
      %113 = sbr.rel (0) target = $region41
    $region40: #{tpu_custom_call.1} parent=1 // pred_region
      %115 = dma.done [#allocation3], 512
    $region41: #{tpu_custom_call.1} parent=1 // pred_fallthru
      _
    // Predicated region
    $region42: #{tpu_custom_call.1} parent=1 // pred_check
      _
    $region43: #{tpu_custom_call.1} parent=1 // pred_check_branch
      %117 = sbr.rel (0) target = $region45
    $region44: #{tpu_custom_call.1} parent=1 // pred_region
      %119 = dma.done [#allocation6], 512
    $region45: #{tpu_custom_call.1} parent=1 // pred_fallthru
      _
    // Predicated region
    $region46: #{tpu_custom_call.1} parent=1 // pred_check
      _
    $region47: #{tpu_custom_call.1} parent=1 // pred_check_branch
      %121 = sbr.rel (0) target = $region49
    $region48: #{tpu_custom_call.1} parent=1 // pred_region
      %123 = dma.done [#allocation6], 32
    $region49: #{tpu_custom_call.1} parent=1 // pred_fallthru
      _
    // Predicated region
    $region50: #{tpu_custom_call.1} parent=1 // pred_check
      _
    $region51: #{tpu_custom_call.1} parent=1 // pred_check_branch
      %125 = sbr.rel (0) target = $region53
    $region52: #{tpu_custom_call.1} parent=1 // pred_region
      %127 = dma.done [#allocation9], 512
    $region53: #{tpu_custom_call.1} parent=1 // pred_fallthru
      _
    // Predicated region
    $region54: #{tpu_custom_call.1} parent=1 // pred_check
      _
    $region55: #{tpu_custom_call.1} parent=1 // pred_check_branch
      %129 = sbr.rel (0) target = $region57
    $region56: #{tpu_custom_call.1} parent=1 // pred_region
      %131 = dma.done [#allocation9], 512
    $region57: #{tpu_custom_call.1} parent=1 // pred_fallthru
      _
    // Predicated region
    $region58: #{tpu_custom_call.1} parent=1 // pred_check
      _
    $region59: #{tpu_custom_call.1} parent=1 // pred_check_branch
      %133 = sbr.rel (0) target = $region61
    $region60: #{tpu_custom_call.1} parent=1 // pred_region
      %135 = dma.done [#allocation12], 512
    $region61: #{tpu_custom_call.1} parent=1 // pred_fallthru
      _
    // Predicated region
    $region62: #{tpu_custom_call.1} parent=1 // pred_check
      _
    $region63: #{tpu_custom_call.1} parent=1 // pred_check_branch
      %137 = sbr.rel (0) target = $region65
    $region64: #{tpu_custom_call.1} parent=1 // pred_region
      %139 = dma.done [#allocation12], 512
    $region65: #{tpu_custom_call.1} parent=1 // pred_fallthru
      _
    %v140 = vld [vmem:[#allocation2] sm:$0xff]
    %v141 = vld [vmem:[#allocation2 + $0x8] sm:$0xff]
    %v142 = vld [vmem:[#allocation2 + $0x10] sm:$0xff]
    %v143 = vld [vmem:[#allocation2 + $0x18] sm:$0xff]
    %v144 = vld [vmem:[#allocation5] sm:$0xff]
    %v145 = vld [vmem:[#allocation5 + $0x8] sm:$0xff]
    %v146 = vld [vmem:[#allocation5 + $0x10] sm:$0xff]
    %v147 = vld [vmem:[#allocation5 + $0x18] sm:$0xff]
    %v148 = vld [vmem:[#allocation7] sm:$0x3]
    %v149 = vld [vmem:[#allocation8] sm:$0xff]
    %v150 = vld [vmem:[#allocation8 + $0x8] sm:$0xff]
    %v151 = vld [vmem:[#allocation8 + $0x10] sm:$0xff]
    %v152 = vld [vmem:[#allocation8 + $0x18] sm:$0xff]
    %v153 = vld [vmem:[#allocation10] sm:$0xff]
    %v154 = vld [vmem:[#allocation10 + $0x8] sm:$0xff]
    %v155 = vld [vmem:[#allocation10 + $0x10] sm:$0xff]
    %v156 = vld [vmem:[#allocation10 + $0x18] sm:$0xff]
    %vm157 = vcmask 261120
    %v159 = vsel %vm157, %v140, 0
    %v162 = vsel %vm157, %v141, 0
    %v165 = vsel %vm157, %v142, 0
    %v168 = vsel %vm157, %v143, 0
    %170 = vmatpush.msra.mxu0 0.0
    %171 = vmatpush.msra.mxu0 0.0
    %172 = vmatpush.msra.mxu0 0.0
    %173 = vmatpush.msra.mxu0 0.0
    %174 = vmatpush.msra.mxu0 0.0
    %175 = vmatpush.msra.mxu0 0.0
    %176 = vmatpush.msra.mxu0 0.0
    %177 = vmatpush.msra.mxu0 0.0
    %178 = vmatpush.msra.mxu0 0.0
    %179 = vmatpush.msra.mxu0 0.0
    %180 = vmatpush.msra.mxu0 0.0
    %181 = vmatpush.msra.mxu0 0.0
    %182 = vmatpush.msra.mxu0 %v152
    %183 = vmatpush.msra.mxu0 %v151
    %184 = vmatpush.msra.mxu0 %v150
    %185 = vmatpush.msra.mxu0 %v149
    %186 = vmatmul.f32.gmra.mxu0 %v159
    %v187 = vpop.f32.mrf.mxu0
    %v188 = vadd.f32 0.0, %v187
    %189 = vmatmul.f32.gmra.mxu0 %v162
    %v190 = vpop.f32.mrf.mxu0
    %v191 = vadd.f32 0.0, %v190
    %192 = vmatmul.f32.gmra.mxu0 %v165
    %v193 = vpop.f32.mrf.mxu0
    %v194 = vadd.f32 0.0, %v193
    %195 = vmatmul.f32.gmra.mxu0 %v168
    %v196 = vpop.f32.mrf.mxu0
    %v197 = vadd.f32 0.0, %v196
    %198 = vdwg.mxu0
    %v199 = vmax.f32 %v188, 0.0
    %v200 = vmax.f32 %v191, 0.0
    %v201 = vmax.f32 %v194, 0.0
    %v202 = vmax.f32 %v197, 0.0
    %v204 = vsel %vm157, %v144, 0
    %v207 = vsel %vm157, %v145, 0
    %v210 = vsel %vm157, %v146, 0
    %v213 = vsel %vm157, %v147, 0
    %215 = vmatpush.msra.mxu0 0.0
    %216 = vmatpush.msra.mxu0 0.0
    %217 = vmatpush.msra.mxu0 0.0
    %218 = vmatpush.msra.mxu0 0.0
    %219 = vmatpush.msra.mxu0 0.0
    %220 = vmatpush.msra.mxu0 0.0
    %221 = vmatpush.msra.mxu0 0.0
    %222 = vmatpush.msra.mxu0 0.0
    %223 = vmatpush.msra.mxu0 0.0
    %224 = vmatpush.msra.mxu0 0.0
    %225 = vmatpush.msra.mxu0 0.0
    %226 = vmatpush.msra.mxu0 0.0
    %227 = vmatpush.msra.mxu0 %v202
    %228 = vmatpush.msra.mxu0 %v201
    %229 = vmatpush.msra.mxu0 %v200
    %230 = vmatpush.msra.mxu0 %v199
    %231 = vmatmul.f32.gmra.mxu0 %v204
    %v232 = vpop.f32.mrf.mxu0
    %v233 = vadd.f32 0.0, %v232
    %234 = vmatmul.f32.gmra.mxu0 %v207
    %v235 = vpop.f32.mrf.mxu0
    %v236 = vadd.f32 0.0, %v235
    %237 = vmatmul.f32.gmra.mxu0 %v210
    %v238 = vpop.f32.mrf.mxu0
    %v239 = vadd.f32 0.0, %v238
    %240 = vmatmul.f32.gmra.mxu0 %v213
    %v241 = vpop.f32.mrf.mxu0
    %v242 = vadd.f32 0.0, %v241
    %243 = vdwg.mxu0
    %v245 = vsel %vm157, %v233, 0
    %v248 = vsel %vm157, %v236, 0
    %v251 = vsel %vm157, %v239, 0
    %v254 = vsel %vm157, %v242, 0
    %256 = vmatpush.msra.mxu0 0.0
    %257 = vmatpush.msra.mxu0 0.0
    %258 = vmatpush.msra.mxu0 0.0
    %259 = vmatpush.msra.mxu0 0.0
    %260 = vmatpush.msra.mxu0 0.0
    %261 = vmatpush.msra.mxu0 0.0
    %262 = vmatpush.msra.mxu0 0.0
    %263 = vmatpush.msra.mxu0 0.0
    %264 = vmatpush.msra.mxu0 0.0
    %265 = vmatpush.msra.mxu0 0.0
    %266 = vmatpush.msra.mxu0 0.0
    %267 = vmatpush.msra.mxu0 0.0
    %268 = vmatpush.msra.mxu0 %v156
    %269 = vmatpush.msra.mxu0 %v155
    %270 = vmatpush.msra.mxu0 %v154
    %271 = vmatpush.msra.mxu0 %v153
    %272 = vmatmul.f32.gmra.mxu0 %v245
    %v273 = vpop.f32.mrf.mxu0
    %v274 = vadd.f32 %v199, %v273
    %275 = vmatmul.f32.gmra.mxu0 %v248
    %v276 = vpop.f32.mrf.mxu0
    %v277 = vadd.f32 %v200, %v276
    %278 = vmatmul.f32.gmra.mxu0 %v251
    %v279 = vpop.f32.mrf.mxu0
    %v280 = vadd.f32 %v201, %v279
    %281 = vmatmul.f32.gmra.mxu0 %v254
    %v282 = vpop.f32.mrf.mxu0
    %v283 = vadd.f32 %v202, %v282
    %284 = vdwg.mxu0
    %v285 = vmax.f32 %v274, 0.0
    %v286 = vmax.f32 %v277, 0.0
    %v287 = vmax.f32 %v280, 0.0
    %v288 = vmax.f32 %v283, 0.0
    %289 = vmatpush.msra.mxu0 0.0
    %290 = vmatpush.msra.mxu0 0.0
    %291 = vmatpush.msra.mxu0 0.0
    %292 = vmatpush.msra.mxu0 0.0
    %293 = vmatpush.msra.mxu0 0.0
    %294 = vmatpush.msra.mxu0 0.0
    %295 = vmatpush.msra.mxu0 0.0
    %296 = vmatpush.msra.mxu0 0.0
    %297 = vmatpush.msra.mxu0 0.0
    %298 = vmatpush.msra.mxu0 0.0
    %299 = vmatpush.msra.mxu0 0.0
    %300 = vmatpush.msra.mxu0 0.0
    %301 = vmatpush.msra.mxu0 %v288
    %302 = vmatpush.msra.mxu0 %v287
    %303 = vmatpush.msra.mxu0 %v286
    %304 = vmatpush.msra.mxu0 %v285
    %305 = vmatmul.f32.gmra.mxu0 %v204
    %v306 = vpop.f32.mrf.mxu0
    %v307 = vadd.f32 0.0, %v306
    %308 = vmatmul.f32.gmra.mxu0 %v207
    %v309 = vpop.f32.mrf.mxu0
    %v310 = vadd.f32 0.0, %v309
    %311 = vmatmul.f32.gmra.mxu0 %v210
    %v312 = vpop.f32.mrf.mxu0
    %v313 = vadd.f32 0.0, %v312
    %314 = vmatmul.f32.gmra.mxu0 %v213
    %v315 = vpop.f32.mrf.mxu0
    %v316 = vadd.f32 0.0, %v315
    %317 = vdwg.mxu0
    %v319 = vsel %vm157, %v307, 0
    %v322 = vsel %vm157, %v310, 0
    %v325 = vsel %vm157, %v313, 0
    %v328 = vsel %vm157, %v316, 0
    %330 = vmatpush.msra.mxu0 0.0
    %331 = vmatpush.msra.mxu0 0.0
    %332 = vmatpush.msra.mxu0 0.0
    %333 = vmatpush.msra.mxu0 0.0
    %334 = vmatpush.msra.mxu0 0.0
    %335 = vmatpush.msra.mxu0 0.0
    %336 = vmatpush.msra.mxu0 0.0
    %337 = vmatpush.msra.mxu0 0.0
    %338 = vmatpush.msra.mxu0 0.0
    %339 = vmatpush.msra.mxu0 0.0
    %340 = vmatpush.msra.mxu0 0.0
    %341 = vmatpush.msra.mxu0 0.0
    %342 = vmatpush.msra.mxu0 %v156
    %343 = vmatpush.msra.mxu0 %v155
    %344 = vmatpush.msra.mxu0 %v154
    %345 = vmatpush.msra.mxu0 %v153
    %346 = vmatmul.f32.gmra.mxu0 %v319
    %v347 = vpop.f32.mrf.mxu0
    %v348 = vadd.f32 %v199, %v347
    %349 = vmatmul.f32.gmra.mxu0 %v322
    %v350 = vpop.f32.mrf.mxu0
    %v351 = vadd.f32 %v200, %v350
    %352 = vmatmul.f32.gmra.mxu0 %v325
    %v353 = vpop.f32.mrf.mxu0
    %v354 = vadd.f32 %v201, %v353
    %355 = vmatmul.f32.gmra.mxu0 %v328
    %v356 = vpop.f32.mrf.mxu0
    %v357 = vadd.f32 %v202, %v356
    %358 = vdwg.mxu0
    %v359 = vmax.f32 %v348, 0.0
    %v360 = vmax.f32 %v351, 0.0
    %v361 = vmax.f32 %v354, 0.0
    %v362 = vmax.f32 %v357, 0.0
    %363 = vmatpush.msra.mxu0 0.0
    %364 = vmatpush.msra.mxu0 0.0
    %365 = vmatpush.msra.mxu0 0.0
    %366 = vmatpush.msra.mxu0 0.0
    %367 = vmatpush.msra.mxu0 0.0
    %368 = vmatpush.msra.mxu0 0.0
    %369 = vmatpush.msra.mxu0 0.0
    %370 = vmatpush.msra.mxu0 0.0
    %371 = vmatpush.msra.mxu0 0.0
    %372 = vmatpush.msra.mxu0 0.0
    %373 = vmatpush.msra.mxu0 0.0
    %374 = vmatpush.msra.mxu0 0.0
    %375 = vmatpush.msra.mxu0 %v362
    %376 = vmatpush.msra.mxu0 %v361
    %377 = vmatpush.msra.mxu0 %v360
    %378 = vmatpush.msra.mxu0 %v359
    %379 = vmatmul.f32.gmra.mxu0 %v204
    %v380 = vpop.f32.mrf.mxu0
    %v381 = vadd.f32 0.0, %v380
    %382 = vmatmul.f32.gmra.mxu0 %v207
    %v383 = vpop.f32.mrf.mxu0
    %v384 = vadd.f32 0.0, %v383
    %385 = vmatmul.f32.gmra.mxu0 %v210
    %v386 = vpop.f32.mrf.mxu0
    %v387 = vadd.f32 0.0, %v386
    %388 = vmatmul.f32.gmra.mxu0 %v213
    %v389 = vpop.f32.mrf.mxu0
    %v390 = vadd.f32 0.0, %v389
    %391 = vdwg.mxu0
    %v393 = vsel %vm157, %v381, 0
    %v396 = vsel %vm157, %v384, 0
    %v399 = vsel %vm157, %v387, 0
    %v402 = vsel %vm157, %v390, 0
    %404 = vmatpush.msra.mxu0 0.0
    %405 = vmatpush.msra.mxu0 0.0
    %406 = vmatpush.msra.mxu0 0.0
    %407 = vmatpush.msra.mxu0 0.0
    %408 = vmatpush.msra.mxu0 0.0
    %409 = vmatpush.msra.mxu0 0.0
    %410 = vmatpush.msra.mxu0 0.0
    %411 = vmatpush.msra.mxu0 0.0
    %412 = vmatpush.msra.mxu0 0.0
    %413 = vmatpush.msra.mxu0 0.0
    %414 = vmatpush.msra.mxu0 0.0
    %415 = vmatpush.msra.mxu0 0.0
    %416 = vmatpush.msra.mxu0 %v156
    %417 = vmatpush.msra.mxu0 %v155
    %418 = vmatpush.msra.mxu0 %v154
    %419 = vmatpush.msra.mxu0 %v153
    %420 = vmatmul.f32.gmra.mxu0 %v393
    %v421 = vpop.f32.mrf.mxu0
    %v422 = vadd.f32 %v199, %v421
    %423 = vmatmul.f32.gmra.mxu0 %v396
    %v424 = vpop.f32.mrf.mxu0
    %v425 = vadd.f32 %v200, %v424
    %426 = vmatmul.f32.gmra.mxu0 %v399
    %v427 = vpop.f32.mrf.mxu0
    %v428 = vadd.f32 %v201, %v427
    %429 = vmatmul.f32.gmra.mxu0 %v402
    %v430 = vpop.f32.mrf.mxu0
    %v431 = vadd.f32 %v202, %v430
    %432 = vdwg.mxu0
    %v433 = vmax.f32 %v422, 0.0
    %v434 = vmax.f32 %v425, 0.0
    %v435 = vmax.f32 %v428, 0.0
    %v436 = vmax.f32 %v431, 0.0
    %v438 = vsel %vm157, %v148, 0
    %440 = vmatpush.msra.mxu0 0.0
    %441 = vmatpush.msra.mxu0 0.0
    %442 = vmatpush.msra.mxu0 0.0
    %443 = vmatpush.msra.mxu0 0.0
    %444 = vmatpush.msra.mxu0 0.0
    %445 = vmatpush.msra.mxu0 0.0
    %446 = vmatpush.msra.mxu0 0.0
    %447 = vmatpush.msra.mxu0 0.0
    %448 = vmatpush.msra.mxu0 0.0
    %449 = vmatpush.msra.mxu0 0.0
    %450 = vmatpush.msra.mxu0 0.0
    %451 = vmatpush.msra.mxu0 0.0
    %452 = vmatpush.msra.mxu0 %v436
    %453 = vmatpush.msra.mxu0 %v435
    %454 = vmatpush.msra.mxu0 %v434
    %455 = vmatpush.msra.mxu0 %v433
    %456 = vmatmul.f32.gmra.mxu0 %v438
    %v457 = vpop.f32.mrf.mxu0
    %v458 = vadd.f32 0.0, %v457
    %459 = vdwg.mxu0
    %v460 = vld [vmem:[#allocation11] sm:$0xff]
    %v461 = vld [vmem:[#allocation11 + $0x8] sm:$0xff]
    %v462 = vld [vmem:[#allocation11 + $0x10] sm:$0xff]
    %v463 = vld [vmem:[#allocation11 + $0x18] sm:$0xff]
    %v464 = vld [vmem:[%s6] sm:$0x1]
    %v466 = vperm.slane %v464, 0
    %v469 = vsel %vm157, %v458, 0
    %471 = vmatpush.msra.mxu0 0.0
    %472 = vmatpush.msra.mxu0 0.0
    %473 = vmatpush.msra.mxu0 0.0
    %474 = vmatpush.msra.mxu0 0.0
    %475 = vmatpush.msra.mxu0 0.0
    %476 = vmatpush.msra.mxu0 0.0
    %477 = vmatpush.msra.mxu0 0.0
    %478 = vmatpush.msra.mxu0 0.0
    %479 = vmatpush.msra.mxu0 0.0
    %480 = vmatpush.msra.mxu0 0.0
    %481 = vmatpush.msra.mxu0 0.0
    %482 = vmatpush.msra.mxu0 0.0
    %483 = vmatpush.msra.mxu0 %v463
    %484 = vmatpush.msra.mxu0 %v462
    %485 = vmatpush.msra.mxu0 %v461
    %486 = vmatpush.msra.mxu0 %v460
    %487 = vmatmul.f32.gmra.mxu0 %v469
    %v488 = vpop.f32.mrf.mxu0
    %v489 = vadd.f32 %v466, %v488
    %490 = vdwg.mxu0
    %v491 = vmax.f32 %v489, 0.0
    %v492 = vld [vmem:[#allocation13] sm:$0xff]
    %v493 = vld [vmem:[#allocation13 + $0x8] sm:$0xff]
    %v494 = vld [vmem:[#allocation13 + $0x10] sm:$0xff]
    %v495 = vld [vmem:[#allocation13 + $0x18] sm:$0xff]
    %v496 = vld [vmem:[%s8] sm:$0x1]
    %v498 = vperm.slane %v496, 0
    %v501 = vsel %vm157, %v491, 0
    %503 = vmatpush.msra.mxu0 0.0
    %504 = vmatpush.msra.mxu0 0.0
    %505 = vmatpush.msra.mxu0 0.0
    %506 = vmatpush.msra.mxu0 0.0
    %507 = vmatpush.msra.mxu0 0.0
    %508 = vmatpush.msra.mxu0 0.0
    %509 = vmatpush.msra.mxu0 0.0
    %510 = vmatpush.msra.mxu0 0.0
    %511 = vmatpush.msra.mxu0 0.0
    %512 = vmatpush.msra.mxu0 0.0
    %513 = vmatpush.msra.mxu0 0.0
    %514 = vmatpush.msra.mxu0 0.0
    %515 = vmatpush.msra.mxu0 %v495
    %516 = vmatpush.msra.mxu0 %v494
    %517 = vmatpush.msra.mxu0 %v493
    %518 = vmatpush.msra.mxu0 %v492
    %519 = vmatmul.f32.gmra.mxu0 %v501
    %v520 = vpop.f32.mrf.mxu0
    %v521 = vadd.f32 %v498, %v520
    %522 = vdwg.mxu0
    %523 = vst [vmem:[#allocation14] sm:$0x3] %v521
    // Predicated region
    $region66: #{tpu_custom_call.1} parent=1 // pred_check
      _
    $region67: #{tpu_custom_call.1} parent=1 // pred_check_branch
      %525 = sbr.rel (0) target = $region69
    $region68: #{tpu_custom_call.1} parent=1 // pred_region
      %527 = vsyncadd [#allocation4], 0
      %s529 = sshll.u32 [#allocation14], 4
      %s530 = int_to_ptr.vmem [resolvable:$true] %s529
      %s531 = sshll.u32 %s9, 4
      %s532 = int_to_ptr.hbm [resolvable:$true] %s531
      %534 = dma.vmem_to_hbm [thread:$0]  %s530, 32, %s532, [#allocation4]
    $region69: #{tpu_custom_call.1} parent=1 // pred_fallthru
      _
    // Predicated region
    $region70: #{tpu_custom_call.1} parent=1 // pred_check
      _
    $region71: #{tpu_custom_call.1} parent=1 // pred_check_branch
      %536 = sbr.rel (0) target = $region73
    $region72: #{tpu_custom_call.1} parent=1 // pred_region
      %538 = dma.done [#allocation4], 32
    $region73: #{tpu_custom_call.1} parent=1 // pred_fallthru
      _
    %539 = vsyncpa [#allocation3], 1
    %540 = vsyncpa [#allocation6], 1
    %541 = vsyncpa [#allocation9], 1
    %542 = vsyncpa [#allocation12], 1
    %543 = vsyncpa [#allocation4], 1

</llo_original>
